<compile_context>
chip_gen: v5e
topology: v5e:2x2
jax: 0.10.0
libtpu: 0.0.40
codegen_flags: <defaults>
</compile_context>

<pallas_src>
import jax
import jax.numpy as jnp
from jax.experimental import pallas as pl
from jax.experimental.pallas import tpu as pltpu


# ---------------------------------------------------------------------------
# Kernels (VPU elementwise path; accumulate in f32, cast back to output dtype)
# ---------------------------------------------------------------------------
def _mean2_kernel(a_ref, b_ref, o_ref):
    a = a_ref[...].astype(jnp.float32)
    b = b_ref[...].astype(jnp.float32)
    o_ref[...] = ((a + b) * 0.5).astype(o_ref.dtype)


def _mean3_kernel(a_ref, b_ref, c_ref, o_ref):
    a = a_ref[...].astype(jnp.float32)
    b = b_ref[...].astype(jnp.float32)
    c = c_ref[...].astype(jnp.float32)
    o_ref[...] = ((a + b + c) * (1.0 / 3.0)).astype(o_ref.dtype)


# ---------------------------------------------------------------------------
# Tiling policy
# ---------------------------------------------------------------------------
_VMEM_LIMIT_BYTES = 32 * 1024 * 1024      # safe scoped limit on v5e/v6e/v7x
_TILE_TARGET_BYTES = 2 * 1024 * 1024      # ~2 MiB per tile (mem-bound sweet spot)
_SMALL_ELEMS = 1 << 16                    # below this, plain jnp is faster


def _round_up(x, m):
    return ((x + m - 1) // m) * m


def _choose_tm(M, N, dtype, n_streams):
    """Pick the batch-axis tile size for a (tm, N) lane-dense block."""
    itemsize = jnp.dtype(dtype).itemsize
    sub = max(8, 32 // itemsize)          # sublane packing: 8 f32, 16 bf16, 32 i8
    row_bytes = max(1, N * itemsize)

    # Keep 2 buffers x n_streams tiles comfortably under the scoped VMEM limit.
    tile_budget = min(_TILE_TARGET_BYTES,
                      (_VMEM_LIMIT_BYTES - 4 * 1024 * 1024) // (2 * n_streams))
    rows = max(sub, (tile_budget // row_bytes) // sub * sub)

    if M <= rows:
        if M >= 2 * sub:
            # Split into >= 2 grid steps so both v7x TensorCores get work.
            return min(rows, _round_up(-(-M // 2), sub))
        return M  # single block; block shape equals full array dims (allowed)
    return rows


def _tiled_mean(arrays):
    n = len(arrays)
    kernel = _mean2_kernel if n == 2 else _mean3_kernel
    a = arrays[0]
    M, N = a.shape
    tm = _choose_tm(M, N, a.dtype, n + 1)
    grid = (pl.cdiv(M, tm),)
    spec = pl.BlockSpec((tm, N), lambda i: (i, 0))   # lane-dense: full dim per block
    return pl.pallas_call(
        kernel,
        out_shape=jax.ShapeDtypeStruct((M, N), a.dtype),
        grid=grid,
        in_specs=[spec] * n,
        out_specs=spec,
        compiler_params=pltpu.CompilerParams(
            dimension_semantics=("parallel",),
            vmem_limit_bytes=_VMEM_LIMIT_BYTES,
        ),
    )(*arrays)


# ---------------------------------------------------------------------------
# Public wrapper (mirrors MeanSet.forward)
# ---------------------------------------------------------------------------
def mean_set(embeds1, embeds1_o, embeds2, embeds2_o, embeds3=None, embeds3_o=None,
             *, force_pallas=False):
    """Pallas equivalent of MeanSet.forward.

    embeds*_o are accepted (to mirror the PyTorch signature) but unused,
    exactly as in the reference module.  embeds3 may be None / empty to select
    the 2-input branch (like `len(embeds3) > 0` in the original).
    """
    has3 = embeds3 is not None and getattr(embeds3, "size", len(embeds3)) > 0
    arrays = [embeds1, embeds2, embeds3] if has3 else [embeds1, embeds2]

    # Tiny-input fast path: custom-call launch overhead dwarfs the data movement.
    if not force_pallas and arrays[0].size < _SMALL_ELEMS:
        scale = 1.0 / len(arrays)
        acc = sum(a.astype(jnp.float32) for a in arrays)
        return (acc * scale).astype(arrays[0].dtype)

    # Flatten any leading dims so the kernel sees a 2-D [rows, dim] layout.
    orig_shape = arrays[0].shape
    dim = orig_shape[-1]
    flat = [a.reshape(-1, dim) for a in arrays]
    out = _tiled_mean(flat)
    return out.reshape(orig_shape)


# ---------------------------------------------------------------------------
# Demo / correctness check
# ---------------------------------------------------------------------------
if __name__ == "__main__":
    key = jax.random.PRNGKey(0)
    k1, k2, k3, k4, k5, k6 = jax.random.split(key, 6)

    # Small embedding shapes consistent with the module: batch=8, hidden=256.
    B, D = 8, 256
    embeds1 = jax.random.normal(k1, (B, D), dtype=jnp.float32)
    embeds1_o = jax.random.normal(k2, (B, D), dtype=jnp.float32)
    embeds2 = jax.random.normal(k3, (B, D), dtype=jnp.float32)
    embeds2_o = jax.random.normal(k4, (B, D), dtype=jnp.float32)
    embeds3 = jax.random.normal(k5, (B, D), dtype=jnp.float32)
    embeds3_o = jax.random.normal(k6, (B, D), dtype=jnp.float32)

    # 2-input branch (embeds3 empty) -- wrapper (fast path at this size).
    out2 = jax.block_until_ready(mean_set(embeds1, embeds1_o, embeds2, embeds2_o))
    ref2 = jnp.mean(jnp.stack([embeds1, embeds2], axis=0), axis=0)
    assert jnp.allclose(out2, ref2, atol=1e-6), "2-input mean mismatch (fast path)"

    # 3-input branch -- wrapper (fast path at this size).
    out3 = jax.block_until_ready(
        mean_set(embeds1, embeds1_o, embeds2, embeds2_o, embeds3, embeds3_o))
    ref3 = jnp.mean(jnp.stack([embeds1, embeds2, embeds3], axis=0), axis=0)
    assert jnp.allclose(out3, ref3, atol=1e-6), "3-input mean mismatch (fast path)"

    # Same shapes, forcing the Pallas kernel path.
    out2p = jax.block_until_ready(
        mean_set(embeds1, embeds1_o, embeds2, embeds2_o, force_pallas=True))
    assert jnp.allclose(out2p, ref2, atol=1e-6), "2-input mean mismatch (pallas)"

    out3p = jax.block_until_ready(
        mean_set(embeds1, embeds1_o, embeds2, embeds2_o, embeds3, embeds3_o,
                 force_pallas=True))
    assert jnp.allclose(out3p, ref3, atol=1e-6), "3-input mean mismatch (pallas)"

    # Slightly larger f32 case to exercise a multi-step (parallel) grid.
    kb = jax.random.split(jax.random.PRNGKey(1), 3)
    Bb, Db = 64, 512
    a = jax.random.normal(kb[0], (Bb, Db), dtype=jnp.float32)
    b = jax.random.normal(kb[1], (Bb, Db), dtype=jnp.float32)
    c = jax.random.normal(kb[2], (Bb, Db), dtype=jnp.float32)
    outL = jax.block_until_ready(mean_set(a, None, b, None, c, None, force_pallas=True))
    refL = jnp.mean(jnp.stack([a, b, c], axis=0), axis=0)
    assert jnp.allclose(outL, refL, atol=1e-6), "3-input mean mismatch (pallas, grid>1)"

    # bf16 case to exercise the 16-row sublane-aligned tiling.
    a16 = a[:32, :128].astype(jnp.bfloat16)
    b16 = b[:32, :128].astype(jnp.bfloat16)
    out16 = jax.block_until_ready(mean_set(a16, None, b16, None, force_pallas=True))
    ref16 = jnp.mean(jnp.stack([a16, b16], axis=0).astype(jnp.float32), axis=0)
    assert jnp.allclose(out16.astype(jnp.float32), ref16, atol=1e-2), \
        "2-input bf16 mean mismatch (pallas)"

    print("KERNEL_OK")
</pallas_src>

<mosaic_0001>
module attributes {stable_mosaic.version = 11 : i64} {
  func.func @_mean2_kernel(%arg0: i32, %arg1: memref<8x256xf32, #tpu.memory_space<vmem>>, %arg2: memref<8x256xf32, #tpu.memory_space<vmem>>, %arg3: memref<8x256xf32, #tpu.memory_space<vmem>>) attributes {dimension_semantics = [#tpu.dimension_semantics<parallel>], iteration_bounds = array<i64: 1>, scalar_prefetch = 0 : i64, scratch_operands = 0 : i64, tpu.core_type = #tpu.core_type<tc>, window_params = [{transform_indices = @transform_0, window_bounds = array<i64: 8, 256>}, {transform_indices = @transform_1, window_bounds = array<i64: 8, 256>}, {transform_indices = @transform_2, window_bounds = array<i64: 8, 256>}]} {
    %c0 = arith.constant 0 : index
    %c0_0 = arith.constant 0 : index
    %0 = vector.load %arg1[%c0, %c0_0] : memref<8x256xf32, #tpu.memory_space<vmem>>, vector<8x256xf32>
    %c0_1 = arith.constant 0 : index
    %c0_2 = arith.constant 0 : index
    %1 = vector.load %arg2[%c0_1, %c0_2] : memref<8x256xf32, #tpu.memory_space<vmem>>, vector<8x256xf32>
    %2 = arith.addf %0, %1 : vector<8x256xf32>
    %cst = arith.constant 5.000000e-01 : f32
    %3 = vector.broadcast %cst : f32 to vector<8x256xf32>
    %4 = arith.mulf %2, %3 : vector<8x256xf32>
    %c0_3 = arith.constant 0 : index
    %c0_4 = arith.constant 0 : index
    %5 = vector.load %arg3[%c0_3, %c0_4] : memref<8x256xf32, #tpu.memory_space<vmem>>, vector<8x256xf32>
    tpu.vector_store %arg3[%c0_3, %c0_4], %4 {strides = array<i32>} : memref<8x256xf32, #tpu.memory_space<vmem>>, vector<8x256xf32>,
    return
  }
  func.func @transform_0(%arg0: i32) -> (i32, i32) {
    %c0_i32 = arith.constant 0 : i32
    %c0_i32_0 = arith.constant 0 : i32
    return %arg0, %c0_i32 : i32, i32
  }
  func.func @transform_1(%arg0: i32) -> (i32, i32) {
    %c0_i32 = arith.constant 0 : i32
    %c0_i32_0 = arith.constant 0 : i32
    return %arg0, %c0_i32 : i32, i32
  }
  func.func @transform_2(%arg0: i32) -> (i32, i32) {
    %c0_i32 = arith.constant 0 : i32
    %c0_i32_0 = arith.constant 0 : i32
    return %arg0, %c0_i32 : i32, i32
  }
}

</mosaic_0001>

<llo_original>
// kernel: tpu_custom_call.1
$region0: #{tpu_custom_call.1}
  #allocation0 [shape = 'u32[]', space=smem, size = 0x4, offset = 0x4, fixed_abs, tag = 'smem constant byte address 0x4 - core index']
  #allocation1 [shape = 'u32[72,128]{1,0:T(1,128)}', space=vmem, size = 0x9000, scoped, tag = 'internal scratch']
  %s0 = inlined_call_operand.hbm [shape: f32[8,256], index: 0, kind: input, shape index: {}]
  %s1 = inlined_call_operand.hbm [shape: f32[8,256], index: 1, kind: input, shape index: {}]
  %s2 = inlined_call_operand.hbm [shape: f32[8,256], index: 2, kind: output, shape index: {}]
  %s3 = sld [smem:[#allocation0]]
  $region26: #{tpu_custom_call.1} parent=0
    _
  %s5 = ssub.s32 1, %s3
  %s6 = scalar_select 0, %s5, %s3
  $region1: #{tpu_custom_call.1} parent=0
    #allocation2 [shape = 'u8[8192]{0}', space=vmem, size = 0x2000, scoped, tag = 'input window, operand 0, single buffered']
    #allocation3 [shape = 's32[1]{0}', space=sflag, size = 0x4, scoped, tag = 'scoped memory for tpu_custom_call.1']
    #allocation4 [shape = 's32[1]{0}', space=sflag, size = 0x4, scoped, tag = 'scoped memory for tpu_custom_call.1']
    #allocation5 [shape = 'u8[8192]{0}', space=vmem, size = 0x2000, scoped, tag = 'input window, operand 1, single buffered']
    #allocation6 [shape = 's32[1]{0}', space=sflag, size = 0x4, scoped, tag = 'scoped memory for tpu_custom_call.1']
    #allocation7 [shape = 'u8[8192]{0}', space=vmem, size = 0x2000, scoped, tag = 'output window, operand 0, single buffered']
    %7 = vsyncpa [#allocation3], 0
    %8 = vsyncpa [#allocation6], 0
    %9 = vsyncpa [#allocation4], 0
    // Predicated region
    $region2: #{tpu_custom_call.1} parent=1 // pred_check
      _
    $region3: #{tpu_custom_call.1} parent=1 // pred_check_branch
      %11 = sbr.rel (0) target = $region5
    $region4: #{tpu_custom_call.1} parent=1 // pred_region
      %13 = vsyncadd [#allocation3], 0
      %s15 = sshll.u32 %s0, 4
      %s16 = int_to_ptr.hbm [resolvable:$true] %s15
      %s17 = sshll.u32 [#allocation2], 4
      %s18 = int_to_ptr.vmem [resolvable:$true] %s17
      %20 = dma.hbm_to_vmem [thread:$0]  %s16, 256, %s18, [#allocation3]
    $region5: #{tpu_custom_call.1} parent=1 // pred_fallthru
      _
    // Predicated region
    $region6: #{tpu_custom_call.1} parent=1 // pred_check
      _
    $region7: #{tpu_custom_call.1} parent=1 // pred_check_branch
      %22 = sbr.rel (0) target = $region9
    $region8: #{tpu_custom_call.1} parent=1 // pred_region
      %24 = vsyncadd [#allocation6], 0
      %s26 = sshll.u32 %s1, 4
      %s27 = int_to_ptr.hbm [resolvable:$true] %s26
      %s28 = sshll.u32 [#allocation5], 4
      %s29 = int_to_ptr.vmem [resolvable:$true] %s28
      %31 = dma.hbm_to_vmem [thread:$0]  %s27, 256, %s29, [#allocation6]
    $region9: #{tpu_custom_call.1} parent=1 // pred_fallthru
      _
    // Predicated region
    $region10: #{tpu_custom_call.1} parent=1 // pred_check
      _
    $region11: #{tpu_custom_call.1} parent=1 // pred_check_branch
      %33 = sbr.rel (0) target = $region13
    $region12: #{tpu_custom_call.1} parent=1 // pred_region
      %35 = dma.done [#allocation3], 256
    $region13: #{tpu_custom_call.1} parent=1 // pred_fallthru
      _
    // Predicated region
    $region14: #{tpu_custom_call.1} parent=1 // pred_check
      _
    $region15: #{tpu_custom_call.1} parent=1 // pred_check_branch
      %37 = sbr.rel (0) target = $region17
    $region16: #{tpu_custom_call.1} parent=1 // pred_region
      %39 = dma.done [#allocation6], 256
    $region17: #{tpu_custom_call.1} parent=1 // pred_fallthru
      _
    %v40 = vld [vmem:[#allocation2] sm:$0xff]
    %v41 = vld [vmem:[#allocation2 + $0x8] sm:$0xff]
    %v42 = vld [vmem:[#allocation5] sm:$0xff]
    %v43 = vld [vmem:[#allocation5 + $0x8] sm:$0xff]
    %v44 = vadd.f32 %v40, %v42
    %v45 = vadd.f32 %v41, %v43
    %v46 = vmul.f32 %v44, 0.5
    %v47 = vmul.f32 %v45, 0.5
    %48 = vst [vmem:[#allocation7] sm:$0xff] %v46
    %49 = vst [vmem:[#allocation7 + $0x8] sm:$0xff] %v47
    // Predicated region
    $region18: #{tpu_custom_call.1} parent=1 // pred_check
      _
    $region19: #{tpu_custom_call.1} parent=1 // pred_check_branch
      %51 = sbr.rel (0) target = $region21
    $region20: #{tpu_custom_call.1} parent=1 // pred_region
      %53 = vsyncadd [#allocation4], 0
      %s55 = sshll.u32 [#allocation7], 4
      %s56 = int_to_ptr.vmem [resolvable:$true] %s55
      %s57 = sshll.u32 %s2, 4
      %s58 = int_to_ptr.hbm [resolvable:$true] %s57
      %60 = dma.vmem_to_hbm [thread:$0]  %s56, 256, %s58, [#allocation4]
    $region21: #{tpu_custom_call.1} parent=1 // pred_fallthru
      _
    // Predicated region
    $region22: #{tpu_custom_call.1} parent=1 // pred_check
      _
    $region23: #{tpu_custom_call.1} parent=1 // pred_check_branch
      %62 = sbr.rel (0) target = $region25
    $region24: #{tpu_custom_call.1} parent=1 // pred_region
      %64 = dma.done [#allocation4], 256
    $region25: #{tpu_custom_call.1} parent=1 // pred_fallthru
      _
    %65 = vsyncpa [#allocation3], 1
    %66 = vsyncpa [#allocation6], 1
    %67 = vsyncpa [#allocation4], 1

</llo_original>
